<compile_context>
chip_gen: v6e
topology: v6e:2x2x1
jax: 0.10.0
libtpu: 0.0.40
codegen_flags: <defaults>
</compile_context>

<pallas_src>
import functools
import math

import jax
import jax.numpy as jnp
from jax import lax
from jax.experimental import pallas as pl
from jax.experimental.pallas import tpu as pltpu

_LANES = 128
_ROW_ALIGN = 16          # keep block rows a multiple of 16 so half-blocks are 8-aligned
_MAX_BLOCK_ROWS = 2048   # 2048*128*4B = 1 MiB per f32 buffer


def _mix32(h):
    """splitmix32/murmur3-style finalizer on uint32 (bijective, good avalanche)."""
    h = h ^ (h >> 16)
    h = h * jnp.uint32(0x7FEB352D)
    h = h ^ (h >> 15)
    h = h * jnp.uint32(0x846CA68B)
    h = h ^ (h >> 16)
    return h


def _gaussian_noise_kernel(seed_ref, x_ref, o_ref, *, mean, std, block_rows):
    half = block_rows // 2

    # ---- per-pair unique counters (unique across all grid blocks) ----------
    row = lax.broadcasted_iota(jnp.int32, (half, _LANES), 0)
    lane = lax.broadcasted_iota(jnp.int32, (half, _LANES), 1)
    pair_idx = (pl.program_id(0) * half + row) * _LANES + lane
    counter = pair_idx.astype(jnp.uint32)

    # ---- two independent 32-bit streams keyed off the seed -----------------
    seed_u = seed_ref[0].astype(jnp.uint32)
    k0 = _mix32(seed_u + jnp.uint32(0x9E3779B9))
    k1 = _mix32(seed_u + jnp.uint32(0x3C6EF372))
    bits1 = _mix32(counter ^ k0)
    bits2 = _mix32(counter ^ k1)

    # ---- uniforms from the low 23 bits --------------------------------------
    inv_2_23 = jnp.float32(1.0 / 8388608.0)
    m1 = (bits1 & jnp.uint32(0x7FFFFF)).astype(jnp.int32).astype(jnp.float32)
    m2 = (bits2 & jnp.uint32(0x7FFFFF)).astype(jnp.int32).astype(jnp.float32)
    u1 = (m1 + jnp.float32(1.0)) * inv_2_23   # (0, 1]  -> log(u1) finite
    u2 = m2 * inv_2_23                        # [0, 1)

    # ---- Box-Muller: use BOTH outputs (cos for top half, sin for bottom) ----
    r = jnp.sqrt(jnp.float32(-2.0) * jnp.log(u1))
    theta = jnp.float32(2.0 * math.pi) * u2
    z0 = r * jnp.cos(theta)
    z1 = r * jnp.sin(theta)

    stdf = jnp.float32(std)
    top = x_ref[:half, :].astype(jnp.float32) + stdf * z0
    bot = x_ref[half:, :].astype(jnp.float32) + stdf * z1
    if mean != 0.0:  # trace-time skip when mean == 0
        top = top + jnp.float32(mean)
        bot = bot + jnp.float32(mean)

    o_ref[:half, :] = top.astype(o_ref.dtype)
    o_ref[half:, :] = bot.astype(o_ref.dtype)


def gaussian_noise_layer(x, seed, *, mean=0.0, std=0.2, training=True):
    """Pallas equivalent of GaussianNoiseLayer.forward.

    NOTE: the caller must vary `seed` across training steps to get fresh noise.
    """
    if not training:
        return x

    orig_shape = x.shape
    n = int(x.size)

    rows = pl.cdiv(n, _LANES)
    rows_padded = pl.cdiv(rows, _ROW_ALIGN) * _ROW_ALIGN
    padded_n = rows_padded * _LANES

    flat = x.reshape(-1)
    if padded_n != n:
        # Only the ragged tail is padded; common NCHW sizes take the no-pad path.
        flat = jnp.pad(flat, (0, padded_n - n))
    x2d = flat.reshape(rows_padded, _LANES)

    block_rows = min(_MAX_BLOCK_ROWS, rows_padded)   # multiple of 16 by construction
    grid = (pl.cdiv(rows_padded, block_rows),)

    seed_arr = jnp.asarray([seed], dtype=jnp.int32)
    kernel = functools.partial(
        _gaussian_noise_kernel,
        mean=float(mean),
        std=float(std),
        block_rows=block_rows,
    )

    out2d = pl.pallas_call(
        kernel,
        out_shape=jax.ShapeDtypeStruct((rows_padded, _LANES), x.dtype),
        grid_spec=pltpu.PrefetchScalarGridSpec(
            num_scalar_prefetch=1,   # seed lives in SMEM, available before the pipeline
            grid=grid,
            in_specs=[
                pl.BlockSpec((block_rows, _LANES), lambda i, seed_ref: (i, 0)),
            ],
            out_specs=pl.BlockSpec((block_rows, _LANES), lambda i, seed_ref: (i, 0)),
        ),
        compiler_params=pltpu.CompilerParams(
            dimension_semantics=("parallel",),
        ),
    )(seed_arr, x2d)

    out_flat = out2d.reshape(-1)
    if padded_n != n:
        out_flat = out_flat[:n]
    return out_flat.reshape(orig_shape)


if __name__ == "__main__":
    key = jax.random.PRNGKey(0)
    # Small NCHW input consistent with the module's elementwise forward.
    x = jax.random.normal(key, (2, 4, 16, 16), dtype=jnp.float32)

    # Training mode: adds N(0, 0.2) noise generated inside the kernel.
    y = gaussian_noise_layer(x, seed=42, mean=0.0, std=0.2, training=True)
    y = jax.block_until_ready(y)

    assert y.shape == x.shape and y.dtype == x.dtype
    diff = y - x
    assert bool(jnp.all(jnp.isfinite(diff)))
    # Empirical noise statistics should be roughly (0, 0.2) over 2048 samples.
    emp_mean = float(jnp.mean(diff))
    emp_std = float(jnp.std(diff))
    assert abs(emp_mean) < 0.05, emp_mean
    assert abs(emp_std - 0.2) < 0.05, emp_std

    # Different seeds produce different noise.
    y2 = gaussian_noise_layer(x, seed=43, mean=0.0, std=0.2, training=True)
    assert not bool(jnp.all(y2 == y))

    # Eval mode: identity.
    y_eval = gaussian_noise_layer(x, seed=42, training=False)
    assert bool(jnp.all(y_eval == x))

    print("KERNEL_OK")
</pallas_src>

<mosaic_0001>
module attributes {stable_mosaic.version = 11 : i64} {
  func.func @_gaussian_noise_kernel(%arg0: i32, %arg1: memref<1xi32, #tpu.memory_space<smem>>, %arg2: memref<16x128xf32, #tpu.memory_space<vmem>>, %arg3: memref<16x128xf32, #tpu.memory_space<vmem>>) attributes {dimension_semantics = [#tpu.dimension_semantics<parallel>], iteration_bounds = array<i64: 1>, scalar_prefetch = 1 : i64, scratch_operands = 0 : i64, tpu.core_type = #tpu.core_type<tc>, window_params = [{transform_indices = @transform_0, window_bounds = array<i64: 16, 128>}, {transform_indices = @transform_1, window_bounds = array<i64: 16, 128>}]} {
    %0 = tpu.iota {dimensions = array<i32: 0>} : vector<8x128xi32>
    %1 = tpu.iota {dimensions = array<i32: 1>} : vector<8x128xi32>
    %c8_i32 = arith.constant 8 : i32
    %2 = arith.muli %arg0, %c8_i32 : i32
    %3 = vector.broadcast %2 : i32 to vector<8x128xi32>
    %4 = arith.addi %3, %0 : vector<8x128xi32>
    %c128_i32 = arith.constant 128 : i32
    %5 = vector.broadcast %c128_i32 : i32 to vector<8x128xi32>
    %6 = arith.muli %4, %5 : vector<8x128xi32>
    %7 = arith.addi %6, %1 : vector<8x128xi32>
    %c0 = arith.constant 0 : index
    %8 = memref.load %arg1[%c0] : memref<1xi32, #tpu.memory_space<smem>>
    %c-1640531527_i32 = arith.constant -1640531527 : i32
    %9 = arith.addi %8, %c-1640531527_i32 : i32
    %c16_i32 = arith.constant 16 : i32
    %10 = arith.shrui %9, %c16_i32 : i32
    %11 = arith.xori %9, %10 : i32
    %c2146121005_i32 = arith.constant 2146121005 : i32
    %12 = arith.muli %11, %c2146121005_i32 : i32
    %c15_i32 = arith.constant 15 : i32
    %13 = arith.shrui %12, %c15_i32 : i32
    %14 = arith.xori %12, %13 : i32
    %c-2073254261_i32 = arith.constant -2073254261 : i32
    %15 = arith.muli %14, %c-2073254261_i32 : i32
    %c16_i32_0 = arith.constant 16 : i32
    %16 = arith.shrui %15, %c16_i32_0 : i32
    %17 = arith.xori %15, %16 : i32
    %c1013904242_i32 = arith.constant 1013904242 : i32
    %18 = arith.addi %8, %c1013904242_i32 : i32
    %c16_i32_1 = arith.constant 16 : i32
    %19 = arith.shrui %18, %c16_i32_1 : i32
    %20 = arith.xori %18, %19 : i32
    %c2146121005_i32_2 = arith.constant 2146121005 : i32
    %21 = arith.muli %20, %c2146121005_i32_2 : i32
    %c15_i32_3 = arith.constant 15 : i32
    %22 = arith.shrui %21, %c15_i32_3 : i32
    %23 = arith.xori %21, %22 : i32
    %c-2073254261_i32_4 = arith.constant -2073254261 : i32
    %24 = arith.muli %23, %c-2073254261_i32_4 : i32
    %c16_i32_5 = arith.constant 16 : i32
    %25 = arith.shrui %24, %c16_i32_5 : i32
    %26 = arith.xori %24, %25 : i32
    %27 = vector.broadcast %17 : i32 to vector<8x128xi32>
    %28 = arith.xori %7, %27 : vector<8x128xi32>
    %c16_i32_6 = arith.constant 16 : i32
    %29 = vector.broadcast %c16_i32_6 : i32 to vector<8x128xi32>
    %30 = arith.shrui %28, %29 : vector<8x128xi32>
    %31 = arith.xori %28, %30 : vector<8x128xi32>
    %c2146121005_i32_7 = arith.constant 2146121005 : i32
    %32 = vector.broadcast %c2146121005_i32_7 : i32 to vector<8x128xi32>
    %33 = arith.muli %31, %32 : vector<8x128xi32>
    %c15_i32_8 = arith.constant 15 : i32
    %34 = vector.broadcast %c15_i32_8 : i32 to vector<8x128xi32>
    %35 = arith.shrui %33, %34 : vector<8x128xi32>
    %36 = arith.xori %33, %35 : vector<8x128xi32>
    %c-2073254261_i32_9 = arith.constant -2073254261 : i32
    %37 = vector.broadcast %c-2073254261_i32_9 : i32 to vector<8x128xi32>
    %38 = arith.muli %36, %37 : vector<8x128xi32>
    %c16_i32_10 = arith.constant 16 : i32
    %39 = vector.broadcast %c16_i32_10 : i32 to vector<8x128xi32>
    %40 = arith.shrui %38, %39 : vector<8x128xi32>
    %41 = arith.xori %38, %40 : vector<8x128xi32>
    %42 = vector.broadcast %26 : i32 to vector<8x128xi32>
    %43 = arith.xori %7, %42 : vector<8x128xi32>
    %c16_i32_11 = arith.constant 16 : i32
    %44 = vector.broadcast %c16_i32_11 : i32 to vector<8x128xi32>
    %45 = arith.shrui %43, %44 : vector<8x128xi32>
    %46 = arith.xori %43, %45 : vector<8x128xi32>
    %c2146121005_i32_12 = arith.constant 2146121005 : i32
    %47 = vector.broadcast %c2146121005_i32_12 : i32 to vector<8x128xi32>
    %48 = arith.muli %46, %47 : vector<8x128xi32>
    %c15_i32_13 = arith.constant 15 : i32
    %49 = vector.broadcast %c15_i32_13 : i32 to vector<8x128xi32>
    %50 = arith.shrui %48, %49 : vector<8x128xi32>
    %51 = arith.xori %48, %50 : vector<8x128xi32>
    %c-2073254261_i32_14 = arith.constant -2073254261 : i32
    %52 = vector.broadcast %c-2073254261_i32_14 : i32 to vector<8x128xi32>
    %53 = arith.muli %51, %52 : vector<8x128xi32>
    %c16_i32_15 = arith.constant 16 : i32
    %54 = vector.broadcast %c16_i32_15 : i32 to vector<8x128xi32>
    %55 = arith.shrui %53, %54 : vector<8x128xi32>
    %56 = arith.xori %53, %55 : vector<8x128xi32>
    %c8388607_i32 = arith.constant 8388607 : i32
    %57 = vector.broadcast %c8388607_i32 : i32 to vector<8x128xi32>
    %58 = arith.andi %41, %57 : vector<8x128xi32>
    %59 = arith.sitofp %58 : vector<8x128xi32> to vector<8x128xf32>
    %c8388607_i32_16 = arith.constant 8388607 : i32
    %60 = vector.broadcast %c8388607_i32_16 : i32 to vector<8x128xi32>
    %61 = arith.andi %56, %60 : vector<8x128xi32>
    %62 = arith.sitofp %61 : vector<8x128xi32> to vector<8x128xf32>
    %cst = arith.constant 1.000000e+00 : f32
    %63 = vector.broadcast %cst : f32 to vector<8x128xf32>
    %64 = arith.addf %59, %63 : vector<8x128xf32>
    %cst_17 = arith.constant 1.1920929E-7 : f32
    %65 = vector.broadcast %cst_17 : f32 to vector<8x128xf32>
    %66 = arith.mulf %64, %65 : vector<8x128xf32>
    %cst_18 = arith.constant 1.1920929E-7 : f32
    %67 = vector.broadcast %cst_18 : f32 to vector<8x128xf32>
    %68 = arith.mulf %62, %67 : vector<8x128xf32>
    %69 = math.log %66 : vector<8x128xf32>
    %cst_19 = arith.constant -2.000000e+00 : f32
    %70 = vector.broadcast %cst_19 : f32 to vector<8x128xf32>
    %71 = arith.mulf %70, %69 : vector<8x128xf32>
    %72 = math.sqrt %71 : vector<8x128xf32>
    %cst_20 = arith.constant 6.28318548 : f32
    %73 = vector.broadcast %cst_20 : f32 to vector<8x128xf32>
    %74 = arith.mulf %73, %68 : vector<8x128xf32>
    %75 = math.cos %74 : vector<8x128xf32>
    %76 = arith.mulf %72, %75 : vector<8x128xf32>
    %77 = math.sin %74 : vector<8x128xf32>
    %78 = arith.mulf %72, %77 : vector<8x128xf32>
    %c0_21 = arith.constant 0 : index
    %c0_22 = arith.constant 0 : index
    %79 = vector.load %arg2[%c0_21, %c0_22] : memref<16x128xf32, #tpu.memory_space<vmem>>, vector<8x128xf32>
    %cst_23 = arith.constant 2.000000e-01 : f32
    %80 = vector.broadcast %cst_23 : f32 to vector<8x128xf32>
    %81 = arith.mulf %80, %76 : vector<8x128xf32>
    %82 = arith.addf %79, %81 : vector<8x128xf32>
    %c8 = arith.constant 8 : index
    %c0_24 = arith.constant 0 : index
    %83 = vector.load %arg2[%c8, %c0_24] : memref<16x128xf32, #tpu.memory_space<vmem>>, vector<8x128xf32>
    %cst_25 = arith.constant 2.000000e-01 : f32
    %84 = vector.broadcast %cst_25 : f32 to vector<8x128xf32>
    %85 = arith.mulf %84, %78 : vector<8x128xf32>
    %86 = arith.addf %83, %85 : vector<8x128xf32>
    %c0_26 = arith.constant 0 : index
    %c0_27 = arith.constant 0 : index
    %87 = vector.load %arg3[%c0_26, %c0_27] : memref<16x128xf32, #tpu.memory_space<vmem>>, vector<8x128xf32>
    tpu.vector_store %arg3[%c0_26, %c0_27], %82 {strides = array<i32>} : memref<16x128xf32, #tpu.memory_space<vmem>>, vector<8x128xf32>,
    %c8_28 = arith.constant 8 : index
    %c0_29 = arith.constant 0 : index
    %88 = vector.load %arg3[%c8_28, %c0_29] : memref<16x128xf32, #tpu.memory_space<vmem>>, vector<8x128xf32>
    tpu.vector_store %arg3[%c8_28, %c0_29], %86 {strides = array<i32>} : memref<16x128xf32, #tpu.memory_space<vmem>>, vector<8x128xf32>,
    return
  }
  func.func @transform_0(%arg0: i32, %arg1: memref<1xi32, #tpu.memory_space<smem>>) -> (i32, i32) {
    %c0_i32 = arith.constant 0 : i32
    %c0_i32_0 = arith.constant 0 : i32
    return %arg0, %c0_i32 : i32, i32
  }
  func.func @transform_1(%arg0: i32, %arg1: memref<1xi32, #tpu.memory_space<smem>>) -> (i32, i32) {
    %c0_i32 = arith.constant 0 : i32
    %c0_i32_0 = arith.constant 0 : i32
    return %arg0, %c0_i32 : i32, i32
  }
}

</mosaic_0001>

<llo_original>
// kernel: tpu_custom_call.1
$region0: #{tpu_custom_call.1}
  #allocation0 [shape = 'u32[]', space=smem, size = 0x4, offset = 0x4, fixed_abs, tag = 'smem constant byte address 0x4 - core index']
  #allocation1 [shape = 'u32[144,128]{1,0:T(1,128)}', space=vmem, size = 0x12000, scoped, tag = 'internal scratch']
  #allocation2 [shape = 's32[1]{0}', space=sflag, size = 0x4, scoped, tag = 'scoped memory for tpu_custom_call.1']
  #allocation3 [shape = 's32[1]{0:T(128)S(6)}', space=smem, size = 0x200, scoped, tag = 'prefetched SMEM operand 0']
  %s0 = inlined_call_operand.<no memory space> [shape: s32[1], index: 0, kind: input, shape index: {}]
  %s1 = inlined_call_operand.hbm [shape: f32[16,128], index: 1, kind: input, shape index: {}]
  %s2 = inlined_call_operand.hbm [shape: f32[16,128], index: 2, kind: output, shape index: {}]
  %s3 = sld [smem:[#allocation0]]
  $region18: #{tpu_custom_call.1} parent=0
    _
  %s5 = ssub.s32 1, %s3
  %s6 = scalar_select 0, %s5, %s3
  %7 = sst [smem:[#allocation3]] %s0
  $region1: #{tpu_custom_call.1} parent=0
    #allocation4 [shape = 'u8[8192]{0}', space=vmem, size = 0x2000, scoped, tag = 'input window, operand 1, single buffered']
    #allocation5 [shape = 's32[1]{0}', space=sflag, size = 0x4, scoped, tag = 'scoped memory for tpu_custom_call.1']
    #allocation6 [shape = 's32[1]{0}', space=sflag, size = 0x4, scoped, tag = 'scoped memory for tpu_custom_call.1']
    #allocation7 [shape = 'u8[8192]{0}', space=vmem, size = 0x2000, scoped, tag = 'output window, operand 0, single buffered']
    %8 = vsyncpa [#allocation5], 0
    %9 = vsyncpa [#allocation6], 0
    // Predicated region
    $region2: #{tpu_custom_call.1} parent=1 // pred_check
      _
    $region3: #{tpu_custom_call.1} parent=1 // pred_check_branch
      %11 = sbr.rel (0) target = $region5
    $region4: #{tpu_custom_call.1} parent=1 // pred_region
      %s13 = ssub.s32 256, 256
      %14 = vsyncadd [#allocation5], %s13
      %s15 = sshll.u32 [#allocation4], 4
      %s16 = int_to_ptr.vmem [resolvable:$true] %s15
      %21 = dma.hbm_to_vmem [thread:$0]  %s1, 256, %s16, [#allocation5], 128, 128, 8
    $region5: #{tpu_custom_call.1} parent=1 // pred_fallthru
      _
    // Predicated region
    $region6: #{tpu_custom_call.1} parent=1 // pred_check
      _
    $region7: #{tpu_custom_call.1} parent=1 // pred_check_branch
      %23 = sbr.rel (0) target = $region9
    $region8: #{tpu_custom_call.1} parent=1 // pred_region
      %24 = dma.done [#allocation5], 256
    $region9: #{tpu_custom_call.1} parent=1 // pred_fallthru
      _
    %v25 = vlaneseq
    %v26 = vshrl.u32 %v25, 7
    %v27 = vlaneseq
    %v28 = vand.u32 %v27, 127
    %s29 = smul.u32 0, 8
    %v30 = vstv %s29
    %v31 = vadd.s32 %v30, %v26
    %v32 = vmul.u32 %v31, 128
    %v33 = vadd.s32 %v32, %v28
    %s34 = sld [smem:[#allocation3]]
    %s35 = sadd.s32 %s34, 2654435769
    %s36 = sshrl.u32 %s35, 16
    %s37 = sxor.u32 %s35, %s36
    %s38 = smul.u32 %s37, 2146121005
    %s39 = sshrl.u32 %s38, 15
    %s40 = sxor.u32 %s38, %s39
    %s41 = smul.u32 %s40, 2221713035
    %s42 = sshrl.u32 %s41, 16
    %s43 = sxor.u32 %s41, %s42
    %s44 = sadd.s32 %s34, 1013904242
    %s45 = sshrl.u32 %s44, 16
    %s46 = sxor.u32 %s44, %s45
    %s47 = smul.u32 %s46, 2146121005
    %s48 = sshrl.u32 %s47, 15
    %s49 = sxor.u32 %s47, %s48
    %s50 = smul.u32 %s49, 2221713035
    %s51 = sshrl.u32 %s50, 16
    %s52 = sxor.u32 %s50, %s51
    %v53 = vstv %s43
    %v54 = vxor.u32 %v33, %v53
    %v55 = vshrl.u32 %v54, 16
    %v56 = vxor.u32 %v54, %v55
    %v57 = vmul.u32 %v56, 2146121005
    %v58 = vshrl.u32 %v57, 15
    %v59 = vxor.u32 %v57, %v58
    %v60 = vmul.u32 %v59, 2221713035
    %v61 = vshrl.u32 %v60, 16
    %v62 = vxor.u32 %v60, %v61
    %v63 = vstv %s52
    %v64 = vxor.u32 %v33, %v63
    %v65 = vshrl.u32 %v64, 16
    %v66 = vxor.u32 %v64, %v65
    %v67 = vmul.u32 %v66, 2146121005
    %v68 = vshrl.u32 %v67, 15
    %v69 = vxor.u32 %v67, %v68
    %v70 = vmul.u32 %v69, 2221713035
    %v71 = vshrl.u32 %v70, 16
    %v72 = vxor.u32 %v70, %v71
    %v73 = vand.u32 %v62, 8388607
    %v74 = vcvt.s32.f32 %v73
    %v75 = vand.u32 %v72, 8388607
    %v76 = vcvt.s32.f32 %v75
    %v77 = vadd.f32 %v74, 1.0
    %v78 = vmul.f32 %v77, 1.1920929e-07
    %v79 = vmul.f32 %v76, 1.1920929e-07
    %v80 = vlog2.pop %v78
    %v81 = vmul.f32 %v80, 0.6931472
    %v82 = vmul.f32 %v81, -2.0
    %v83 = vrsqrt.pop %v82
    %v84 = vmul.f32 %v82, %v83
    %vm85 = vcmp.eq.f32.partialorder %v82, inf
    %v86 = vsel %vm85, %v82, %v84
    %vm87 = vcmp.eq.f32.partialorder %v82, 0.0
    %v88 = vand.u32 %v82, 2147483648
    %v89 = vsel %vm87, %v88, %v86
    %v90 = vmul.f32 %v79, 6.2831855
    %v91 = vand.u32 2147483647, %v90
    %vm92 = vcmp.le.f32.partialorder %v91, 0.7853982
    %vm93 = vcmp.lt.s32.totalorder %v90, 0
    %v94 = vand.u32 %v90, 2139095040
    %v95 = vshrl.u32 %v94, 23
    %v96 = vsub.s32 %v95, 127
    %v97 = vand.u32 2147483647, %v90
    %v98 = vand.u32 %v97, 8388607
    %v99 = vor.u32 %v98, 8388608
    %v100 = vsub.s32 0, %v99
    %v101 = vadd.s32 %v96, 1
    %vm102 = vcmp.gt.s32.totalorder %v101, 0
    %v103 = vsel %vm102, %v101, 0
    %v104 = vshrl.u32 %v103, 5
    %v105 = vand.u32 %v103, 31
    %v106 = vsub.s32 32, %v105
    %v107 = vshrl.u32 683565275, %v106
    %v108 = vshll.u32 683565275, %v105
    %v109 = vshrl.u32 2475754826, %v106
    %v110 = vor.u32 %v108, %v109
    %v111 = vshll.u32 2475754826, %v105
    %v112 = vshrl.u32 2131351028, %v106
    %v113 = vor.u32 %v111, %v112
    %v114 = vshll.u32 2131351028, %v105
    %v115 = vshrl.u32 2102212464, %v106
    %v116 = vor.u32 %v114, %v115
    %v117 = vshll.u32 2102212464, %v105
    %v118 = vshrl.u32 920167782, %v106
    %v119 = vor.u32 %v117, %v118
    %v120 = vshll.u32 920167782, %v105
    %v121 = vshrl.u32 1326507024, %v106
    %v122 = vor.u32 %v120, %v121
    %vm123 = vcmp.lt.s32.totalorder %v104, 1
    %vm124 = vcmp.lt.s32.totalorder %v104, 2
    %vm125 = vcmp.lt.s32.totalorder %v104, 3
    %vm126 = vcmp.lt.s32.totalorder %v104, 4
    %v127 = vsel %vm123, %v107, %v110
    %v128 = vsel %vm126, %v116, 2102212464
    %v129 = vsel %vm125, %v113, %v128
    %v130 = vsel %vm124, %v127, %v129
    %v131 = vsel %vm123, %v110, %v113
    %v132 = vsel %vm126, %v119, 920167782
    %v133 = vsel %vm125, %v116, %v132
    %v134 = vsel %vm124, %v131, %v133
    %v135 = vsel %vm123, %v113, %v116
    %v136 = vsel %vm126, %v122, 1326507024
    %v137 = vsel %vm125, %v119, %v136
    %v138 = vsel %vm124, %v135, %v137
    %v139 = vshll.u32 %v99, 8
    %v140 = vmul.u32.u64.compose %v139, %v138
    %v141 = vextract.low.u32 %v140
    %v142 = vextract.high.u32 %v140
    %v143 = vmul.u32.u64.compose %v139, %v134
    %v144 = vextract.low.u32 %v143
    %v145 = vextract.high.u32 %v143
    %v146 = vmul.u32 %v139, %v130
    %v147 = vadd.s32 %v142, %v144
    %vm148 = vc.u32 %v142, %v144
    %v149 = vadd.s32 %v145, 1
    %v150 = vsel %vm148, %v149, %v145
    %v151 = vadd.s32 %v146, %v150
    %v152 = vadd.s32 %v151, 536870912
    %v153 = vshrl.u32 %v152, 30
    %v154 = vshll.u32 %v153, 30
    %v155 = vsub.s32 %v151, %v154
    %vm156 = vcmp.lt.s32.totalorder %v155, 0
    %v157 = vsub.s32 0, %v155
    %v158 = vsel %vm156, %v157, %v155
    %v159 = vclz %v158
    %v160 = vsub.s32 %v159, 2
    %vm161 = vcmp.gt.s32.totalorder 0, %v160
    %v162 = vsel %vm161, 0, %v160
    %v163 = vsub.s32 32, %v162
    %v164 = vshll.u32 %v155, %v162
    %v165 = vshrl.u32 %v147, %v163
    %v166 = vor.u32 %v164, %v165
    %v167 = vsub.s32 4294967266, %v162
    %v168 = vadd.s32 %v167, 127
    %v169 = vshll.u32 %v168, 23
    %v170 = vor.u32 4788187, %v169
    %v171 = vand.u32 2147483647, %v170
    %v173 = vcvt.s32.f32 %v166
    %v174 = vmul.f32 %v173, %v171
    %v175 = vxor.u32 %v174, 2147483648
    %v176 = vsel %vm93, %v175, %v174
    %v177 = vsub.s32 4, %v153
    %v178 = vsel %vm93, %v177, %v153
    %v179 = vsel %vm92, %v90, %v176
    %v180 = vsel %vm92, 0, %v178
    %v181 = vcosq.f32.pop %v179
    %v182 = vsinq.f32.pop %v179
    %vm183 = vweird.f32 %v90
    %v184 = vand.u32 %v180, 3
    %vm185 = vcmp.lt.s32.totalorder %v184, 2
    %vm186 = vcmp.eq.s32.totalorder %v184, 0
    %v187 = vxor.u32 %v182, 2147483648
    %v188 = vsel %vm186, %v181, %v187
    %vm189 = vcmp.eq.s32.totalorder %v184, 2
    %v190 = vxor.u32 %v181, 2147483648
    %v191 = vsel %vm189, %v190, %v182
    %v192 = vsel %vm185, %v188, %v191
    %v193 = vsel %vm183, nan, %v192
    %v194 = vmul.f32 %v89, %v193
    %v195 = vand.u32 2147483647, %v90
    %vm196 = vcmp.le.f32.partialorder %v195, 0.7853982
    %vm197 = vcmp.lt.s32.totalorder %v90, 0
    %v198 = vand.u32 %v90, 2139095040
    %v199 = vshrl.u32 %v198, 23
    %v200 = vsub.s32 %v199, 127
    %v201 = vand.u32 2147483647, %v90
    %v202 = vand.u32 %v201, 8388607
    %v203 = vor.u32 %v202, 8388608
    %v204 = vsub.s32 0, %v203
    %v205 = vadd.s32 %v200, 1
    %vm206 = vcmp.gt.s32.totalorder %v205, 0
    %v207 = vsel %vm206, %v205, 0
    %v208 = vshrl.u32 %v207, 5
    %v209 = vand.u32 %v207, 31
    %v210 = vsub.s32 32, %v209
    %v211 = vshrl.u32 683565275, %v210
    %v212 = vshll.u32 683565275, %v209
    %v213 = vshrl.u32 2475754826, %v210
    %v214 = vor.u32 %v212, %v213
    %v215 = vshll.u32 2475754826, %v209
    %v216 = vshrl.u32 2131351028, %v210
    %v217 = vor.u32 %v215, %v216
    %v218 = vshll.u32 2131351028, %v209
    %v219 = vshrl.u32 2102212464, %v210
    %v220 = vor.u32 %v218, %v219
    %v221 = vshll.u32 2102212464, %v209
    %v222 = vshrl.u32 920167782, %v210
    %v223 = vor.u32 %v221, %v222
    %v224 = vshll.u32 920167782, %v209
    %v225 = vshrl.u32 1326507024, %v210
    %v226 = vor.u32 %v224, %v225
    %vm227 = vcmp.lt.s32.totalorder %v208, 1
    %vm228 = vcmp.lt.s32.totalorder %v208, 2
    %vm229 = vcmp.lt.s32.totalorder %v208, 3
    %vm230 = vcmp.lt.s32.totalorder %v208, 4
    %v231 = vsel %vm227, %v211, %v214
    %v232 = vsel %vm230, %v220, 2102212464
    %v233 = vsel %vm229, %v217, %v232
    %v234 = vsel %vm228, %v231, %v233
    %v235 = vsel %vm227, %v214, %v217
    %v236 = vsel %vm230, %v223, 920167782
    %v237 = vsel %vm229, %v220, %v236
    %v238 = vsel %vm228, %v235, %v237
    %v239 = vsel %vm227, %v217, %v220
    %v240 = vsel %vm230, %v226, 1326507024
    %v241 = vsel %vm229, %v223, %v240
    %v242 = vsel %vm228, %v239, %v241
    %v243 = vshll.u32 %v203, 8
    %v244 = vmul.u32.u64.compose %v243, %v242
    %v245 = vextract.low.u32 %v244
    %v246 = vextract.high.u32 %v244
    %v247 = vmul.u32.u64.compose %v243, %v238
    %v248 = vextract.low.u32 %v247
    %v249 = vextract.high.u32 %v247
    %v250 = vmul.u32 %v243, %v234
    %v251 = vadd.s32 %v246, %v248
    %vm252 = vc.u32 %v246, %v248
    %v253 = vadd.s32 %v249, 1
    %v254 = vsel %vm252, %v253, %v249
    %v255 = vadd.s32 %v250, %v254
    %v256 = vadd.s32 %v255, 536870912
    %v257 = vshrl.u32 %v256, 30
    %v258 = vshll.u32 %v257, 30
    %v259 = vsub.s32 %v255, %v258
    %vm260 = vcmp.lt.s32.totalorder %v259, 0
    %v261 = vsub.s32 0, %v259
    %v262 = vsel %vm260, %v261, %v259
    %v263 = vclz %v262
    %v264 = vsub.s32 %v263, 2
    %vm265 = vcmp.gt.s32.totalorder 0, %v264
    %v266 = vsel %vm265, 0, %v264
    %v267 = vsub.s32 32, %v266
    %v268 = vshll.u32 %v259, %v266
    %v269 = vshrl.u32 %v251, %v267
    %v270 = vor.u32 %v268, %v269
    %v271 = vsub.s32 4294967266, %v266
    %v272 = vadd.s32 %v271, 127
    %v273 = vshll.u32 %v272, 23
    %v274 = vor.u32 4788187, %v273
    %v275 = vand.u32 2147483647, %v274
    %v277 = vcvt.s32.f32 %v270
    %v278 = vmul.f32 %v277, %v275
    %v279 = vxor.u32 %v278, 2147483648
    %v280 = vsel %vm197, %v279, %v278
    %v281 = vsub.s32 4, %v257
    %v282 = vsel %vm197, %v281, %v257
    %v283 = vsel %vm196, %v90, %v280
    %v284 = vsel %vm196, 0, %v282
    %v285 = vcosq.f32.pop %v283
    %v286 = vsinq.f32.pop %v283
    %vm287 = vweird.f32 %v90
    %v288 = vadd.s32 %v284, 3
    %v289 = vand.u32 %v288, 3
    %vm290 = vcmp.lt.s32.totalorder %v289, 2
    %vm291 = vcmp.eq.s32.totalorder %v289, 0
    %v292 = vxor.u32 %v286, 2147483648
    %v293 = vsel %vm291, %v285, %v292
    %vm294 = vcmp.eq.s32.totalorder %v289, 2
    %v295 = vxor.u32 %v285, 2147483648
    %v296 = vsel %vm294, %v295, %v286
    %v297 = vsel %vm290, %v293, %v296
    %v298 = vsel %vm287, nan, %v297
    %v299 = vmul.f32 %v89, %v298
    %v300 = vld [vmem:[#allocation4] sm:$0xff]
    %v301 = vmul.f32 %v194, 0.2
    %v302 = vadd.f32 %v300, %v301
    %v303 = vld [vmem:[#allocation4 + $0x8] sm:$0xff]
    %v304 = vmul.f32 %v299, 0.2
    %v305 = vadd.f32 %v303, %v304
    %306 = vst [vmem:[#allocation7] sm:$0xff] %v302
    %307 = vst [vmem:[#allocation7 + $0x8] sm:$0xff] %v305
    // Predicated region
    $region10: #{tpu_custom_call.1} parent=1 // pred_check
      _
    $region11: #{tpu_custom_call.1} parent=1 // pred_check_branch
      %309 = sbr.rel (0) target = $region13
    $region12: #{tpu_custom_call.1} parent=1 // pred_region
      %s311 = ssub.s32 256, 256
      %312 = vsyncadd [#allocation6], %s311
      %s313 = sshll.u32 [#allocation7], 4
      %s314 = int_to_ptr.vmem [resolvable:$true] %s313
      %319 = dma.vmem_to_hbm [thread:$0]  %s314, 256, %s2, [#allocation6], 128, 128, 8
    $region13: #{tpu_custom_call.1} parent=1 // pred_fallthru
      _
    // Predicated region
    $region14: #{tpu_custom_call.1} parent=1 // pred_check
      _
    $region15: #{tpu_custom_call.1} parent=1 // pred_check_branch
      %321 = sbr.rel (0) target = $region17
    $region16: #{tpu_custom_call.1} parent=1 // pred_region
      %322 = dma.done [#allocation6], 256
    $region17: #{tpu_custom_call.1} parent=1 // pred_fallthru
      _
    %323 = vsyncpa [#allocation5], 1
    %324 = vsyncpa [#allocation6], 1

</llo_original>
